<compile_context>
chip_gen: v6e
topology: v6e:2x2x1
jax: 0.10.0
libtpu: 0.0.40
codegen_flags: <defaults>
</compile_context>

<pallas_src>
import jax
import jax.numpy as jnp
import numpy as np
from jax.experimental import pallas as pl
from jax.experimental.pallas import tpu as pltpu

_VMEM_LIMIT = 32 * 1024 * 1024  # explicit scoped-VMEM budget, safe on v5e/v6e/v7x


# --------------------------------------------------------------------------
# Kernel 1: fused  Linear -> (folded) BatchNorm1d -> ReLU
#           rows = flattened (B * num_points), tiled along the row axis.
# --------------------------------------------------------------------------
def _linear_bn_relu_kernel(x_ref, w_ref, shift_ref, o_ref):
    x = x_ref[...].astype(jnp.bfloat16)                        # (TM, Din) bf16 for MXU
    y = jnp.dot(x, w_ref[...], preferred_element_type=jnp.float32)  # (TM, Dout) f32 acc
    o_ref[...] = jnp.maximum(y + shift_ref[...], 0.0)          # folded bias/BN + ReLU


def linear_bn_relu(x, w_bf16, shift, *, tile_m=512):
    B, P, Din = x.shape
    Dout = w_bf16.shape[1]
    R = B * P
    x2 = x.reshape(R, Din)                                     # free reshape (contiguous)
    tm = min(tile_m, R)
    out = pl.pallas_call(
        _linear_bn_relu_kernel,
        out_shape=jax.ShapeDtypeStruct((R, Dout), jnp.float32),
        grid=(pl.cdiv(R, tm),),
        in_specs=[
            pl.BlockSpec((tm, Din), lambda i: (i, 0)),
            pl.BlockSpec((Din, Dout), lambda i: (0, 0)),
            pl.BlockSpec((1, Dout), lambda i: (0, 0)),
        ],
        out_specs=pl.BlockSpec((tm, Dout), lambda i: (i, 0)),
        compiler_params=pltpu.CompilerParams(
            dimension_semantics=("parallel",),
            vmem_limit_bytes=_VMEM_LIMIT),
    )(x2, w_bf16, shift)
    return out.reshape(B, P, Dout)


# --------------------------------------------------------------------------
# Kernel 2: PointNetFeaturePropagation(-1, []) 3-NN inverse-distance
#           interpolation of feats1 onto the xyz_target points + residual add
#           of feats2.  Grid = (batch, M-tile); full N source set per step.
# --------------------------------------------------------------------------
def _interp_add_kernel(xyz_t_ref, xyz_sT_ref, f1_ref, f2_ref, o_ref):
    pt = xyz_t_ref[0]                                          # (TM, 3) target coords
    psT = xyz_sT_ref[0]                                        # (3, N)  source coords (lane-major N)
    f1 = f1_ref[0]                                             # (N, D)
    TM = pt.shape[0]
    N = psT.shape[1]

    # Squared pairwise distances via 3 VPU broadcast FMAs (no K=3 MXU matmul);
    # non-negative by construction.
    d = jnp.zeros((TM, N), jnp.float32)
    for c in range(3):
        diff = pt[:, c:c + 1] - psT[c:c + 1, :]                # (TM,1) - (1,N) -> (TM,N)
        d = d + diff * diff

    col = jax.lax.broadcasted_iota(jnp.int32, (TM, N), 1)

    sel = jnp.zeros((TM, N), jnp.float32)    # sum_k w_k * onehot(idx_k)  (unnormalized)
    wsum = jnp.zeros((TM, 1), jnp.float32)
    dd = d
    for _ in range(3):                        # iteratively pick the 3 nearest
        dmin = jnp.min(dd, axis=1, keepdims=True)                          # (TM, 1)
        first = jnp.min(jnp.where(dd == dmin, col, N), axis=1, keepdims=True)
        onehot = col == first                                              # first-occurrence match
        w = 1.0 / (dmin + 1e-8)
        sel = sel + jnp.where(onehot, w, 0.0)
        wsum = wsum + w
        dd = jnp.where(onehot, jnp.inf, dd)

    # gather-free interpolation on the MXU; normalize after the matmul.
    interp = jnp.dot(sel, f1, preferred_element_type=jnp.float32)          # (TM, D)
    o_ref[0] = interp * pl.reciprocal(wsum) + f2_ref[0]


def interp_add(xyz_target, xyz_source, feats1, feats2, *, tile_m=256):
    B, M, _ = xyz_target.shape
    _, N, _ = xyz_source.shape
    D = feats1.shape[-1]
    tm = min(tile_m, M)
    xyz_source_t = jnp.swapaxes(xyz_source, 1, 2)              # (B, 3, N): lane-dense N
    return pl.pallas_call(
        _interp_add_kernel,
        out_shape=jax.ShapeDtypeStruct((B, M, D), jnp.float32),
        grid=(B, pl.cdiv(M, tm)),
        in_specs=[
            pl.BlockSpec((1, tm, 3), lambda b, m: (b, m, 0)),
            pl.BlockSpec((1, 3, N), lambda b, m: (b, 0, 0)),   # resident across M tiles
            pl.BlockSpec((1, N, D), lambda b, m: (b, 0, 0)),   # resident across M tiles
            pl.BlockSpec((1, tm, D), lambda b, m: (b, m, 0)),
        ],
        out_specs=pl.BlockSpec((1, tm, D), lambda b, m: (b, m, 0)),
        compiler_params=pltpu.CompilerParams(
            dimension_semantics=("parallel", "parallel"),
            vmem_limit_bytes=_VMEM_LIMIT),
    )(xyz_target, xyz_source_t, feats1, feats2)


# --------------------------------------------------------------------------
# TransitionUp forward (glue around the two Pallas kernels)
# --------------------------------------------------------------------------
def transition_up_forward(params, xyz1, points1, xyz2, points2):
    feats1 = linear_bn_relu(points1, params["w1"], params["shift1"])  # (B, N, Dout)
    feats2 = linear_bn_relu(points2, params["w2"], params["shift2"])  # (B, M, Dout)
    # fp: interpolate feats1 (living on xyz1 points) onto the xyz2 points, add feats2
    return interp_add(xyz2, xyz1, feats1, feats2)                     # (B, M, Dout)


# --------------------------------------------------------------------------
# Deterministic parameter construction (eval-mode BN folded into w / shift)
# --------------------------------------------------------------------------
def make_branch_params(key, din, dout):
    kw, kb, kg, kbt, km, kv = jax.random.split(key, 6)
    w = jax.random.normal(kw, (din, dout), jnp.float32) / np.sqrt(din)
    b = 0.1 * jax.random.normal(kb, (dout,), jnp.float32)
    gamma = 1.0 + 0.1 * jax.random.normal(kg, (dout,), jnp.float32)
    beta = 0.1 * jax.random.normal(kbt, (dout,), jnp.float32)
    mean = 0.1 * jax.random.normal(km, (dout,), jnp.float32)
    var = 1.0 + 0.1 * jnp.abs(jax.random.normal(kv, (dout,), jnp.float32))
    eps = 1e-5
    scale = gamma / jnp.sqrt(var + eps)
    w_folded = (w * scale[None, :]).astype(jnp.bfloat16)     # BN scale folded into weight
    shift = ((b - mean) * scale + beta).reshape(1, dout)     # folded bias + BN shift (f32)
    return w_folded, shift


# --------------------------------------------------------------------------
# Pure-JAX reference (same math, explicit sort/gather) for verification
# --------------------------------------------------------------------------
def reference_forward(params, xyz1, points1, xyz2, points2):
    def branch(x, w_bf16, shift):
        B, P, Din = x.shape
        y = jnp.dot(x.reshape(-1, Din).astype(jnp.bfloat16), w_bf16,
                    preferred_element_type=jnp.float32)
        return jax.nn.relu(y + shift).reshape(B, P, -1)

    f1 = branch(points1, params["w1"], params["shift1"])
    f2 = branch(points2, params["w2"], params["shift2"])
    d = jnp.sum((xyz2[:, :, None, :] - xyz1[:, None, :, :]) ** 2, axis=-1)  # (B, M, N)
    idx = jnp.argsort(d, axis=-1)[..., :3]                                  # (B, M, 3)
    dsel = jnp.take_along_axis(d, idx, axis=-1)
    recip = 1.0 / (dsel + 1e-8)
    wgt = recip / jnp.sum(recip, -1, keepdims=True)
    gathered = jax.vmap(lambda f, i: f[i])(f1, idx)                         # (B, M, 3, D)
    interp = jnp.sum(gathered * wgt[..., None], axis=2)
    return interp + f2


if __name__ == "__main__":
    B, N, M = 2, 8, 16
    dim1, dim2, dim_out = 32, 16, 32

    root = jax.random.PRNGKey(0)
    k_params1, k_params2, kx1, kp1, kx2, kp2 = jax.random.split(root, 6)

    w1, shift1 = make_branch_params(k_params1, dim1, dim_out)
    w2, shift2 = make_branch_params(k_params2, dim2, dim_out)
    params = dict(w1=w1, shift1=shift1, w2=w2, shift2=shift2)

    xyz1 = jax.random.normal(kx1, (B, N, 3), jnp.float32)       # coords of points1
    points1 = jax.random.normal(kp1, (B, N, dim1), jnp.float32)
    xyz2 = jax.random.normal(kx2, (B, M, 3), jnp.float32)       # coords of points2
    points2 = jax.random.normal(kp2, (B, M, dim2), jnp.float32)

    out = transition_up_forward(params, xyz1, points1, xyz2, points2)
    out = jax.block_until_ready(out)

    ref = jax.block_until_ready(reference_forward(params, xyz1, points1, xyz2, points2))
    np.testing.assert_allclose(np.asarray(out), np.asarray(ref), rtol=1e-4, atol=1e-4)
    assert out.shape == (B, M, dim_out)

    print("KERNEL_OK")
</pallas_src>

<mosaic_0001>
module attributes {stable_mosaic.version = 11 : i64} {
  func.func @_linear_bn_relu_kernel(%arg0: i32, %arg1: memref<16x32xf32, #tpu.memory_space<vmem>>, %arg2: memref<32x32xbf16, #tpu.memory_space<vmem>>, %arg3: memref<1x32xf32, #tpu.memory_space<vmem>>, %arg4: memref<16x32xf32, #tpu.memory_space<vmem>>) attributes {dimension_semantics = [#tpu.dimension_semantics<parallel>], iteration_bounds = array<i64: 1>, scalar_prefetch = 0 : i64, scratch_operands = 0 : i64, tpu.core_type = #tpu.core_type<tc>, window_params = [{transform_indices = @transform_0, window_bounds = array<i64: 16, 32>}, {pipeline_mode = #tpu.pipeline_mode<synchronous>, transform_indices = @transform_1, window_bounds = array<i64: 32, 32>}, {pipeline_mode = #tpu.pipeline_mode<synchronous>, transform_indices = @transform_2, window_bounds = array<i64: 1, 32>}, {transform_indices = @transform_3, window_bounds = array<i64: 16, 32>}]} {
    %c0 = arith.constant 0 : index
    %c0_0 = arith.constant 0 : index
    %0 = vector.load %arg1[%c0, %c0_0] : memref<16x32xf32, #tpu.memory_space<vmem>>, vector<16x32xf32>
    %1 = arith.truncf %0 : vector<16x32xf32> to vector<16x32xbf16>
    %c0_1 = arith.constant 0 : index
    %c0_2 = arith.constant 0 : index
    %2 = vector.load %arg2[%c0_1, %c0_2] : memref<32x32xbf16, #tpu.memory_space<vmem>>, vector<32x32xbf16>
    %cst = arith.constant dense<0.000000e+00> : vector<16x32xf32>
    %3 = tpu.matmul %1, %2, %cst {dimension_numbers = #tpu.dot_dimension_numbers<[1], [0], [0], [1], [0, 0, 1, 1], [], []>} : vector<16x32xbf16>, vector<32x32xbf16>, vector<16x32xf32> -> vector<16x32xf32>
    %c0_3 = arith.constant 0 : index
    %c0_4 = arith.constant 0 : index
    %4 = vector.load %arg3[%c0_3, %c0_4] : memref<1x32xf32, #tpu.memory_space<vmem>>, vector<1x32xf32>
    %5 = vector.broadcast %4 : vector<1x32xf32> to vector<16x32xf32>
    %6 = arith.addf %3, %5 : vector<16x32xf32>
    %cst_5 = arith.constant 0.000000e+00 : f32
    %7 = vector.broadcast %cst_5 : f32 to vector<16x32xf32>
    %8 = arith.maximumf %6, %7 : vector<16x32xf32>
    %c0_6 = arith.constant 0 : index
    %c0_7 = arith.constant 0 : index
    %9 = vector.load %arg4[%c0_6, %c0_7] : memref<16x32xf32, #tpu.memory_space<vmem>>, vector<16x32xf32>
    tpu.vector_store %arg4[%c0_6, %c0_7], %8 {strides = array<i32>} : memref<16x32xf32, #tpu.memory_space<vmem>>, vector<16x32xf32>,
    return
  }
  func.func @transform_0(%arg0: i32) -> (i32, i32) {
    %c0_i32 = arith.constant 0 : i32
    %c0_i32_0 = arith.constant 0 : i32
    return %arg0, %c0_i32 : i32, i32
  }
  func.func @transform_1(%arg0: i32) -> (i32, i32) {
    %c0_i32 = arith.constant 0 : i32
    %c0_i32_0 = arith.constant 0 : i32
    %c0_i32_1 = arith.constant 0 : i32
    return %c0_i32, %c0_i32_0 : i32, i32
  }
  func.func @transform_2(%arg0: i32) -> (i32, i32) {
    %c0_i32 = arith.constant 0 : i32
    %c0_i32_0 = arith.constant 0 : i32
    %c0_i32_1 = arith.constant 0 : i32
    return %c0_i32, %c0_i32_0 : i32, i32
  }
  func.func @transform_3(%arg0: i32) -> (i32, i32) {
    %c0_i32 = arith.constant 0 : i32
    %c0_i32_0 = arith.constant 0 : i32
    return %arg0, %c0_i32 : i32, i32
  }
}

</mosaic_0001>

<llo_original>
// kernel: tpu_custom_call.1
$region0: #{tpu_custom_call.1}
  #allocation0 [shape = 'u32[]', space=smem, size = 0x4, offset = 0x4, fixed_abs, tag = 'smem constant byte address 0x4 - core index']
  #allocation1 [shape = 'u32[144,128]{1,0:T(1,128)}', space=vmem, size = 0x12000, scoped, tag = 'internal scratch']
  %s0 = inlined_call_operand.hbm [shape: f32[16,32], index: 0, kind: input, shape index: {}]
  %s1 = inlined_call_operand.hbm [shape: bf16[32,32], index: 1, kind: input, shape index: {}]
  %s2 = inlined_call_operand.vmem [shape: f32[1,32], index: 2, kind: input, shape index: {}]
  %s3 = inlined_call_operand.hbm [shape: f32[16,32], index: 3, kind: output, shape index: {}]
  %s4 = sld [smem:[#allocation0]]
  $region30: #{tpu_custom_call.1} parent=0
    _
  %s6 = ssub.s32 1, %s4
  %s7 = scalar_select 0, %s6, %s4
  $region1: #{tpu_custom_call.1} parent=0
    #allocation2 [shape = 'u8[8192]{0}', space=vmem, size = 0x2000, scoped, tag = 'input window, operand 0, single buffered']
    #allocation3 [shape = 's32[1]{0}', space=sflag, size = 0x4, scoped, tag = 'scoped memory for tpu_custom_call.1']
    #allocation4 [shape = 's32[1]{0}', space=sflag, size = 0x4, scoped, tag = 'scoped memory for tpu_custom_call.1']
    #allocation5 [shape = 'u8[8192]{0}', space=vmem, size = 0x2000, scoped, tag = 'input window, operand 1, single buffered']
    #allocation6 [shape = 's32[1]{0}', space=sflag, size = 0x4, scoped, tag = 'scoped memory for tpu_custom_call.1']
    #allocation7 [shape = 'u8[8192]{0}', space=vmem, size = 0x2000, scoped, tag = 'output window, operand 0, single buffered']
    %8 = vsyncpa [#allocation3], 0
    %9 = vsyncpa [#allocation6], 0
    %10 = vsyncpa [#allocation4], 0
    // Predicated region
    $region2: #{tpu_custom_call.1} parent=1 // pred_check
      _
    $region3: #{tpu_custom_call.1} parent=1 // pred_check_branch
      %12 = sbr.rel (0) target = $region5
    $region4: #{tpu_custom_call.1} parent=1 // pred_region
      %s14 = ssub.s32 256, 256
      %15 = vsyncadd [#allocation3], %s14
      %s16 = sshll.u32 [#allocation2], 4
      %s17 = int_to_ptr.vmem [resolvable:$true] %s16
      %22 = dma.hbm_to_vmem [thread:$0]  %s0, 256, %s17, [#allocation3], 128, 128, 8
    $region5: #{tpu_custom_call.1} parent=1 // pred_fallthru
      _
    // Predicated region
    $region6: #{tpu_custom_call.1} parent=1 // pred_check
      _
    $region7: #{tpu_custom_call.1} parent=1 // pred_check_branch
      %24 = sbr.rel (0) target = $region9
    $region8: #{tpu_custom_call.1} parent=1 // pred_region
      %s26 = ssub.s32 256, 256
      %27 = vsyncadd [#allocation6], %s26
      %s28 = sshll.u32 [#allocation5], 4
      %s29 = int_to_ptr.vmem [resolvable:$true] %s28
      %34 = dma.hbm_to_vmem [thread:$0]  %s1, 256, %s29, [#allocation6], 64, 64, 4
    $region9: #{tpu_custom_call.1} parent=1 // pred_fallthru
      _
    // Predicated region
    $region10: #{tpu_custom_call.1} parent=1 // pred_check
      _
    $region11: #{tpu_custom_call.1} parent=1 // pred_check_branch
      %36 = sbr.rel (0) target = $region13
    $region12: #{tpu_custom_call.1} parent=1 // pred_region
      _
    $region13: #{tpu_custom_call.1} parent=1 // pred_fallthru
      _
    // Predicated region
    $region14: #{tpu_custom_call.1} parent=1 // pred_check
      _
    $region15: #{tpu_custom_call.1} parent=1 // pred_check_branch
      %38 = sbr.rel (0) target = $region17
    $region16: #{tpu_custom_call.1} parent=1 // pred_region
      %39 = dma.done [#allocation3], 256
    $region17: #{tpu_custom_call.1} parent=1 // pred_fallthru
      _
    // Predicated region
    $region18: #{tpu_custom_call.1} parent=1 // pred_check
      _
    $region19: #{tpu_custom_call.1} parent=1 // pred_check_branch
      %41 = sbr.rel (0) target = $region21
    $region20: #{tpu_custom_call.1} parent=1 // pred_region
      %42 = dma.done [#allocation6], 256
    $region21: #{tpu_custom_call.1} parent=1 // pred_fallthru
      _
    %v44 = vld [vmem:[#allocation2] sm:$0xff]
    %v45 = vld [vmem:[#allocation2 + $0x8] sm:$0xff]
    %v46 = vpack.c.bf16 %v45, %v44
    %v47 = vld [vmem:[#allocation5] sm:$0xf]
    %v48 = vld [vmem:[#allocation5 + $0x4] sm:$0xf]
    %v49 = vld [vmem:[#allocation5 + $0x8] sm:$0xf]
    %v50 = vld [vmem:[#allocation5 + $0xc] sm:$0xf]
    %v51 = vld [vmem:[%s2] sm:$0x1]
    %v53 = vlaneseq
    %v54 = vshrl.u32 %v53, 7
    %v55 = vsub.s32 0, %v54
    %v56 = vrot.slane %v51, %v55
    %v62 = vunpack.c.l.b16 %v47
    %v63 = vunpack.c.l.b16 %v48
    %v64 = vunpack.c.l.b16 %v49
    %v65 = vunpack.c.l.b16 %v50
    %v66 = vpack.c.b16 %v63, %v62
    %v67 = vpack.c.b16 %v65, %v64
    %vm70 = vcmask 261120
    %v72 = vsel %vm70, %v46, 0
    %74 = vmatprep.subr.bf16.mxu0 0
    %75 = vmatpush1.bf16.msra.mxu0 0
    %76 = vmatprep.subr.bf16.mxu0 0
    %77 = vmatpush1.bf16.msra.mxu0 0
    %78 = vmatprep.subr.bf16.mxu0 0
    %79 = vmatpush1.bf16.msra.mxu0 0
    %80 = vmatprep.subr.bf16.mxu0 0
    %81 = vmatpush1.bf16.msra.mxu0 0
    %82 = vmatprep.subr.bf16.mxu0 0
    %83 = vmatpush1.bf16.msra.mxu0 0
    %84 = vmatprep.subr.bf16.mxu0 0
    %85 = vmatpush1.bf16.msra.mxu0 0
    %86 = vmatprep.subr.bf16.mxu0 0
    %87 = vmatpush1.bf16.msra.mxu0 %v67
    %88 = vmatprep.subr.bf16.mxu0 0
    %89 = vmatpush1.bf16.msra.mxu0 %v66
    %90 = vmatprep.subr.bf16.mxu0 0
    %91 = vmatpush2.bf16.msra.mxu0 0
    %92 = vmatprep.subr.bf16.mxu0 0
    %93 = vmatpush2.bf16.msra.mxu0 0
    %94 = vmatprep.subr.bf16.mxu0 0
    %95 = vmatpush2.bf16.msra.mxu0 0
    %96 = vmatprep.subr.bf16.mxu0 0
    %97 = vmatpush2.bf16.msra.mxu0 0
    %98 = vmatprep.subr.bf16.mxu0 0
    %99 = vmatpush2.bf16.msra.mxu0 0
    %100 = vmatprep.subr.bf16.mxu0 0
    %101 = vmatpush2.bf16.msra.mxu0 0
    %102 = vmatprep.subr.bf16.mxu0 0
    %103 = vmatpush2.bf16.msra.mxu0 0
    %104 = vmatprep.subr.bf16.mxu0 0
    %105 = vmatpush2.bf16.msra.mxu0 0
    %106 = vmatprep.mubr.bf16.mxu0 0
    %107 = vmatmul.mubr.bf16.gmra.mxu0 %v72
    %v108 = vpop.f32.mrf.mxu0
    %v109 = vadd.f32 %v56, %v108
    %v110 = vpop.f32.mrf.mxu0
    %v111 = vpop.f32.mrf.mxu0
    %v112 = vadd.f32 %v56, %v111
    %v113 = vpop.f32.mrf.mxu0
    %114 = vdwg.mxu0
    %v115 = vmax.f32 %v109, 0.0
    %v116 = vmax.f32 %v112, 0.0
    %117 = vst.msk [vmem:[#allocation7] sm:$0xff] %vm70, %v115
    %118 = vst.msk [vmem:[#allocation7 + $0x8] sm:$0xff] %vm70, %v116
    // Predicated region
    $region22: #{tpu_custom_call.1} parent=1 // pred_check
      _
    $region23: #{tpu_custom_call.1} parent=1 // pred_check_branch
      %120 = sbr.rel (0) target = $region25
    $region24: #{tpu_custom_call.1} parent=1 // pred_region
      %s122 = ssub.s32 256, 256
      %123 = vsyncadd [#allocation4], %s122
      %s124 = sshll.u32 [#allocation7], 4
      %s125 = int_to_ptr.vmem [resolvable:$true] %s124
      %130 = dma.vmem_to_hbm [thread:$0]  %s125, 256, %s3, [#allocation4], 128, 128, 8
    $region25: #{tpu_custom_call.1} parent=1 // pred_fallthru
      _
    // Predicated region
    $region26: #{tpu_custom_call.1} parent=1 // pred_check
      _
    $region27: #{tpu_custom_call.1} parent=1 // pred_check_branch
      %132 = sbr.rel (0) target = $region29
    $region28: #{tpu_custom_call.1} parent=1 // pred_region
      %133 = dma.done [#allocation4], 256
    $region29: #{tpu_custom_call.1} parent=1 // pred_fallthru
      _
    %134 = vsyncpa [#allocation3], 1
    %135 = vsyncpa [#allocation6], 1
    %136 = vsyncpa [#allocation4], 1

</llo_original>
